<compile_context>
chip_gen: v7x
topology: tpu7x:2x2x1
jax: 0.10.0
libtpu: 0.0.40
codegen_flags: <defaults>
</compile_context>

<pallas_src>
import jax
import jax.numpy as jnp
from jax.experimental import pallas as pl
from jax.experimental.pallas import tpu as pltpu


def cvar_kernel(w_ref, weight_ref, data_ref, out_ref):
    # Zero the resident accumulator on the first (and, by default, only) step.
    @pl.when(pl.program_id(0) == 0)
    def _():
        out_ref[...] = jnp.zeros_like(out_ref)

    # Model.sample() for this tile of seeds: cast to bf16 at the MXU boundary
    # (in-kernel, so no extra HBM round trips), accumulate in f32.
    sample = jnp.dot(
        w_ref[...].astype(jnp.bfloat16),
        weight_ref[...].astype(jnp.bfloat16),
        preferred_element_type=jnp.float32,
    )
    # dist(Sample, Data): squared distance, Data broadcast (1, D_OUT) over rows.
    diff = sample - data_ref[...]
    # Lane-dense accumulation: reduce over batch rows, keep feature lanes.
    out_ref[...] += jnp.sum(diff * diff, axis=0, keepdims=True)


def cvar_forward(batch_w, weight, data, quantile, *, tile_b=None):
    b, d_in = batch_w.shape
    d_out = weight.shape[1]
    if tile_b is None:
        tile_b = b  # collapse the grid: one step is the dominant win at these shapes
    tile_b = min(tile_b, b)
    assert b % tile_b == 0, "batch must be a multiple of the batch tile"
    num_tiles = b // tile_b

    bytes_accessed = (
        batch_w.size * batch_w.dtype.itemsize
        + weight.size * weight.dtype.itemsize
        + data.size * data.dtype.itemsize
        + d_out * 4
    )

    sq_sum = pl.pallas_call(
        cvar_kernel,
        out_shape=jax.ShapeDtypeStruct((1, d_out), jnp.float32),
        grid=(num_tiles,),
        in_specs=[
            pl.BlockSpec((tile_b, d_in), lambda i: (i, 0)),   # seed tile
            pl.BlockSpec((d_in, d_out), lambda i: (0, 0)),    # model weights (resident)
            pl.BlockSpec((1, d_out), lambda i: (0, 0)),       # calibration Data (resident)
        ],
        # Single (1, D_OUT) lane-dense accumulator, resident across the grid.
        out_specs=pl.BlockSpec((1, d_out), lambda i: (0, 0)),
        compiler_params=pltpu.CompilerParams(
            dimension_semantics=("arbitrary",),   # batch axis is a reduction
        ),
        cost_estimate=pl.CostEstimate(
            flops=2 * b * d_in * d_out + 3 * b * d_out,
            transcendentals=0,
            bytes_accessed=bytes_accessed,
        ),
    )(batch_w, weight, data)

    # CVaR = sum(diff^2) / (B * D_OUT) + t*0.  The quantile*0 term keeps the
    # parameter in the graph, matching the torch semantics.
    return jnp.sum(sq_sum) * (1.0 / (b * d_out)) + quantile[0] * 0.0


if __name__ == "__main__":
    # Shapes: batch of seeds (B, D_IN), model weight (D_IN, D_OUT), Data (1, D_OUT).
    B, D_IN, D_OUT = 512, 32, 128

    key = jax.random.PRNGKey(0)
    k1, k2, k3 = jax.random.split(key, 3)

    # Batch of seeds handed to Model.seed(w)
    batch_w = jax.random.normal(k1, (B, D_IN), dtype=jnp.float32)
    # Deterministic synthetic "Model" parameters (linear sampler)
    weight = 0.1 * jax.random.normal(k2, (D_IN, D_OUT), dtype=jnp.float32)
    # Calibration Data the distance measure compares against
    data = jax.random.normal(k3, (1, D_OUT), dtype=jnp.float32)
    # self.quantile = nn.Parameter(torch.tensor(1.0))
    quantile = jnp.array([1.0], dtype=jnp.float32)

    cvar = cvar_forward(batch_w, weight, data, quantile)
    cvar = jax.block_until_ready(cvar)

    # Pure-JAX reference with the same bf16-input / f32-accumulation numerics.
    sample_ref = jnp.dot(
        batch_w.astype(jnp.bfloat16),
        weight.astype(jnp.bfloat16),
        preferred_element_type=jnp.float32,
    )
    rho_ref = jnp.mean((sample_ref - data) ** 2, axis=-1)
    ref = jnp.sum(rho_ref) / B + quantile[0] * 0.0
    assert jnp.allclose(cvar, ref, rtol=1e-3, atol=1e-3), (cvar, ref)

    print("KERNEL_OK")
</pallas_src>

<mosaic_0001>
module attributes {stable_mosaic.version = 11 : i64} {
  func.func @cvar_kernel(%arg0: i32, %arg1: memref<512x32xf32, #tpu.memory_space<vmem>>, %arg2: memref<32x128xf32, #tpu.memory_space<vmem>>, %arg3: memref<1x128xf32, #tpu.memory_space<vmem>>, %arg4: memref<1x128xf32, #tpu.memory_space<vmem>>) attributes {dimension_semantics = [#tpu.dimension_semantics<arbitrary>], iteration_bounds = array<i64: 1>, scalar_prefetch = 0 : i64, scratch_operands = 0 : i64, tpu.core_type = #tpu.core_type<tc>, window_params = [{transform_indices = @transform_0, window_bounds = array<i64: 512, 32>}, {pipeline_mode = #tpu.pipeline_mode<synchronous>, transform_indices = @transform_1, window_bounds = array<i64: 32, 128>}, {pipeline_mode = #tpu.pipeline_mode<synchronous>, transform_indices = @transform_2, window_bounds = array<i64: 1, 128>}, {pipeline_mode = #tpu.pipeline_mode<synchronous>, transform_indices = @transform_3, window_bounds = array<i64: 1, 128>}]} {
    %c0_i32 = arith.constant 0 : i32
    %0 = arith.cmpi eq, %arg0, %c0_i32 : i32
    %1 = arith.extui %0 : i1 to i32
    %c0_i32_0 = arith.constant 0 : i32
    %2 = arith.cmpi ne, %1, %c0_i32_0 : i32
    scf.if %2 {
      %cst_11 = arith.constant 0.000000e+00 : f32
      %17 = vector.broadcast %cst_11 : f32 to vector<1x128xf32>
      %c0_12 = arith.constant 0 : index
      %c0_13 = arith.constant 0 : index
      %18 = vector.load %arg4[%c0_12, %c0_13] : memref<1x128xf32, #tpu.memory_space<vmem>>, vector<1x128xf32>
      tpu.vector_store %arg4[%c0_12, %c0_13], %17 {strides = array<i32>} : memref<1x128xf32, #tpu.memory_space<vmem>>, vector<1x128xf32>,
    } else {
    }
    %c0 = arith.constant 0 : index
    %c0_1 = arith.constant 0 : index
    %3 = vector.load %arg1[%c0, %c0_1] : memref<512x32xf32, #tpu.memory_space<vmem>>, vector<512x32xf32>
    %4 = arith.truncf %3 : vector<512x32xf32> to vector<512x32xbf16>
    %c0_2 = arith.constant 0 : index
    %c0_3 = arith.constant 0 : index
    %5 = vector.load %arg2[%c0_2, %c0_3] : memref<32x128xf32, #tpu.memory_space<vmem>>, vector<32x128xf32>
    %6 = arith.truncf %5 : vector<32x128xf32> to vector<32x128xbf16>
    %cst = arith.constant dense<0.000000e+00> : vector<512x128xf32>
    %7 = tpu.matmul %4, %6, %cst {dimension_numbers = #tpu.dot_dimension_numbers<[1], [0], [0], [1], [0, 0, 1, 1], [], []>} : vector<512x32xbf16>, vector<32x128xbf16>, vector<512x128xf32> -> vector<512x128xf32>
    %c0_4 = arith.constant 0 : index
    %c0_5 = arith.constant 0 : index
    %8 = vector.load %arg3[%c0_4, %c0_5] : memref<1x128xf32, #tpu.memory_space<vmem>>, vector<1x128xf32>
    %9 = vector.broadcast %8 : vector<1x128xf32> to vector<512x128xf32>
    %10 = arith.subf %7, %9 : vector<512x128xf32>
    %c0_6 = arith.constant 0 : index
    %c0_7 = arith.constant 0 : index
    %11 = vector.load %arg4[%c0_6, %c0_7] : memref<1x128xf32, #tpu.memory_space<vmem>>, vector<1x128xf32>
    %12 = arith.mulf %10, %10 : vector<512x128xf32>
    %cst_8 = arith.constant dense<0.000000e+00> : vector<128xf32>
    %13 = vector.multi_reduction <add>, %12, %cst_8 [0] : vector<512x128xf32> to vector<128xf32>
    %14 = vector.shape_cast %13 : vector<128xf32> to vector<1x128xf32>
    %15 = arith.addf %11, %14 : vector<1x128xf32>
    %c0_9 = arith.constant 0 : index
    %c0_10 = arith.constant 0 : index
    %16 = vector.load %arg4[%c0_9, %c0_10] : memref<1x128xf32, #tpu.memory_space<vmem>>, vector<1x128xf32>
    tpu.vector_store %arg4[%c0_9, %c0_10], %15 {strides = array<i32>} : memref<1x128xf32, #tpu.memory_space<vmem>>, vector<1x128xf32>,
    return
  }
  func.func @transform_0(%arg0: i32) -> (i32, i32) {
    %c0_i32 = arith.constant 0 : i32
    %c0_i32_0 = arith.constant 0 : i32
    return %arg0, %c0_i32 : i32, i32
  }
  func.func @transform_1(%arg0: i32) -> (i32, i32) {
    %c0_i32 = arith.constant 0 : i32
    %c0_i32_0 = arith.constant 0 : i32
    %c0_i32_1 = arith.constant 0 : i32
    return %c0_i32, %c0_i32_0 : i32, i32
  }
  func.func @transform_2(%arg0: i32) -> (i32, i32) {
    %c0_i32 = arith.constant 0 : i32
    %c0_i32_0 = arith.constant 0 : i32
    %c0_i32_1 = arith.constant 0 : i32
    return %c0_i32, %c0_i32_0 : i32, i32
  }
  func.func @transform_3(%arg0: i32) -> (i32, i32) {
    %c0_i32 = arith.constant 0 : i32
    %c0_i32_0 = arith.constant 0 : i32
    %c0_i32_1 = arith.constant 0 : i32
    return %c0_i32, %c0_i32_0 : i32, i32
  }
}

</mosaic_0001>

<llo_original>
// kernel: tpu_custom_call.1
$region0: #{tpu_custom_call.1}
  #allocation0 [shape = 'u32[]', space=smem, size = 0x4, offset = 0x4, fixed_abs, tag = 'smem constant byte address 0x4 - core index']
  #allocation1 [shape = 'u32[144,128]{1,0:T(1,128)}', space=vmem, size = 0x12000, scoped, tag = 'internal scratch']
  %s0 = inlined_call_operand.vmem [shape: f32[512,32], index: 0, kind: input, shape index: {}]
  %s1 = inlined_call_operand.vmem [shape: f32[32,128], index: 1, kind: input, shape index: {}]
  %s2 = inlined_call_operand.vmem [shape: f32[1,128], index: 2, kind: input, shape index: {}]
  %s3 = inlined_call_operand.hbm [shape: f32[1,128], index: 3, kind: output, shape index: {}]
  %s4 = sld [smem:[#allocation0]]
  $region26: #{tpu_custom_call.1} parent=0
    _
  %s6 = ssub.s32 1, %s4
  %s7 = scalar_select 0, %s6, %s4
  $region1: #{tpu_custom_call.1} parent=0
    #allocation2 [shape = 'u8[512]{0}', space=vmem, size = 0x400, scoped, tag = 'output window, operand 0, single buffered']
    #allocation3 [shape = 's32[1]{0}', space=sflag, size = 0x4, scoped, tag = 'scoped memory for tpu_custom_call.1']
    %8 = vsyncpa [#allocation3], 0
    // Predicated region
    $region2: #{tpu_custom_call.1} parent=1 // pred_check
      _
    $region3: #{tpu_custom_call.1} parent=1 // pred_check_branch
      %10 = sbr.rel (0) target = $region5
    $region4: #{tpu_custom_call.1} parent=1 // pred_region
      _
    $region5: #{tpu_custom_call.1} parent=1 // pred_fallthru
      _
    // Predicated region
    $region6: #{tpu_custom_call.1} parent=1 // pred_check
      _
    $region7: #{tpu_custom_call.1} parent=1 // pred_check_branch
      %12 = sbr.rel (0) target = $region9
    $region8: #{tpu_custom_call.1} parent=1 // pred_region
      _
    $region9: #{tpu_custom_call.1} parent=1 // pred_fallthru
      _
    // Predicated region
    $region10: #{tpu_custom_call.1} parent=1 // pred_check
      _
    $region11: #{tpu_custom_call.1} parent=1 // pred_check_branch
      %14 = sbr.rel (0) target = $region13
    $region12: #{tpu_custom_call.1} parent=1 // pred_region
      _
    $region13: #{tpu_custom_call.1} parent=1 // pred_fallthru
      _
    %p16 = scmp.eq.s32.totalorder 0, 0
    // Predicated region
    $region14: #{tpu_custom_call.1} parent=1 // pred_check
      %p17 = pneg %p16
    $region15: #{tpu_custom_call.1} parent=1 // pred_check_branch
      %19 = sbr.rel (%p17) target = $region17
    $region16: #{tpu_custom_call.1} parent=1 // pred_region
      %20 = vst [vmem:[#allocation2] sm:$0x1] 0.0
    $region17: #{tpu_custom_call.1} parent=1 // pred_fallthru
      _
    %v21 = vld [vmem:[%s0] sm:$0xff]
    %v22 = vld [vmem:[%s0 + $0x8] sm:$0xff]
    %v23 = vld [vmem:[%s0 + $0x10] sm:$0xff]
    %v24 = vld [vmem:[%s0 + $0x18] sm:$0xff]
    %v25 = vld [vmem:[%s0 + $0x20] sm:$0xff]
    %v26 = vld [vmem:[%s0 + $0x28] sm:$0xff]
    %v27 = vld [vmem:[%s0 + $0x30] sm:$0xff]
    %v28 = vld [vmem:[%s0 + $0x38] sm:$0xff]
    %v29 = vld [vmem:[%s0 + $0x40] sm:$0xff]
    %v30 = vld [vmem:[%s0 + $0x48] sm:$0xff]
    %v31 = vld [vmem:[%s0 + $0x50] sm:$0xff]
    %v32 = vld [vmem:[%s0 + $0x58] sm:$0xff]
    %v33 = vld [vmem:[%s0 + $0x60] sm:$0xff]
    %v34 = vld [vmem:[%s0 + $0x68] sm:$0xff]
    %v35 = vld [vmem:[%s0 + $0x70] sm:$0xff]
    %v36 = vld [vmem:[%s0 + $0x78] sm:$0xff]
    %v37 = vld [vmem:[%s0 + $0x80] sm:$0xff]
    %v38 = vld [vmem:[%s0 + $0x88] sm:$0xff]
    %v39 = vld [vmem:[%s0 + $0x90] sm:$0xff]
    %v40 = vld [vmem:[%s0 + $0x98] sm:$0xff]
    %v41 = vld [vmem:[%s0 + $0xa0] sm:$0xff]
    %v42 = vld [vmem:[%s0 + $0xa8] sm:$0xff]
    %v43 = vld [vmem:[%s0 + $0xb0] sm:$0xff]
    %v44 = vld [vmem:[%s0 + $0xb8] sm:$0xff]
    %v45 = vld [vmem:[%s0 + $0xc0] sm:$0xff]
    %v46 = vld [vmem:[%s0 + $0xc8] sm:$0xff]
    %v47 = vld [vmem:[%s0 + $0xd0] sm:$0xff]
    %v48 = vld [vmem:[%s0 + $0xd8] sm:$0xff]
    %v49 = vld [vmem:[%s0 + $0xe0] sm:$0xff]
    %v50 = vld [vmem:[%s0 + $0xe8] sm:$0xff]
    %v51 = vld [vmem:[%s0 + $0xf0] sm:$0xff]
    %v52 = vld [vmem:[%s0 + $0xf8] sm:$0xff]
    %v53 = vld [vmem:[%s0 + $0x100] sm:$0xff]
    %v54 = vld [vmem:[%s0 + $0x108] sm:$0xff]
    %v55 = vld [vmem:[%s0 + $0x110] sm:$0xff]
    %v56 = vld [vmem:[%s0 + $0x118] sm:$0xff]
    %v57 = vld [vmem:[%s0 + $0x120] sm:$0xff]
    %v58 = vld [vmem:[%s0 + $0x128] sm:$0xff]
    %v59 = vld [vmem:[%s0 + $0x130] sm:$0xff]
    %v60 = vld [vmem:[%s0 + $0x138] sm:$0xff]
    %v61 = vld [vmem:[%s0 + $0x140] sm:$0xff]
    %v62 = vld [vmem:[%s0 + $0x148] sm:$0xff]
    %v63 = vld [vmem:[%s0 + $0x150] sm:$0xff]
    %v64 = vld [vmem:[%s0 + $0x158] sm:$0xff]
    %v65 = vld [vmem:[%s0 + $0x160] sm:$0xff]
    %v66 = vld [vmem:[%s0 + $0x168] sm:$0xff]
    %v67 = vld [vmem:[%s0 + $0x170] sm:$0xff]
    %v68 = vld [vmem:[%s0 + $0x178] sm:$0xff]
    %v69 = vld [vmem:[%s0 + $0x180] sm:$0xff]
    %v70 = vld [vmem:[%s0 + $0x188] sm:$0xff]
    %v71 = vld [vmem:[%s0 + $0x190] sm:$0xff]
    %v72 = vld [vmem:[%s0 + $0x198] sm:$0xff]
    %v73 = vld [vmem:[%s0 + $0x1a0] sm:$0xff]
    %v74 = vld [vmem:[%s0 + $0x1a8] sm:$0xff]
    %v75 = vld [vmem:[%s0 + $0x1b0] sm:$0xff]
    %v76 = vld [vmem:[%s0 + $0x1b8] sm:$0xff]
    %v77 = vld [vmem:[%s0 + $0x1c0] sm:$0xff]
    %v78 = vld [vmem:[%s0 + $0x1c8] sm:$0xff]
    %v79 = vld [vmem:[%s0 + $0x1d0] sm:$0xff]
    %v80 = vld [vmem:[%s0 + $0x1d8] sm:$0xff]
    %v81 = vld [vmem:[%s0 + $0x1e0] sm:$0xff]
    %v82 = vld [vmem:[%s0 + $0x1e8] sm:$0xff]
    %v83 = vld [vmem:[%s0 + $0x1f0] sm:$0xff]
    %v84 = vld [vmem:[%s0 + $0x1f8] sm:$0xff]
    %v85 = vpack.c.bf16 %v22, %v21
    %v86 = vpack.c.bf16 %v24, %v23
    %v87 = vpack.c.bf16 %v26, %v25
    %v88 = vpack.c.bf16 %v28, %v27
    %v89 = vpack.c.bf16 %v30, %v29
    %v90 = vpack.c.bf16 %v32, %v31
    %v91 = vpack.c.bf16 %v34, %v33
    %v92 = vpack.c.bf16 %v36, %v35
    %v93 = vpack.c.bf16 %v38, %v37
    %v94 = vpack.c.bf16 %v40, %v39
    %v95 = vpack.c.bf16 %v42, %v41
    %v96 = vpack.c.bf16 %v44, %v43
    %v97 = vpack.c.bf16 %v46, %v45
    %v98 = vpack.c.bf16 %v48, %v47
    %v99 = vpack.c.bf16 %v50, %v49
    %v100 = vpack.c.bf16 %v52, %v51
    %v101 = vpack.c.bf16 %v54, %v53
    %v102 = vpack.c.bf16 %v56, %v55
    %v103 = vpack.c.bf16 %v58, %v57
    %v104 = vpack.c.bf16 %v60, %v59
    %v105 = vpack.c.bf16 %v62, %v61
    %v106 = vpack.c.bf16 %v64, %v63
    %v107 = vpack.c.bf16 %v66, %v65
    %v108 = vpack.c.bf16 %v68, %v67
    %v109 = vpack.c.bf16 %v70, %v69
    %v110 = vpack.c.bf16 %v72, %v71
    %v111 = vpack.c.bf16 %v74, %v73
    %v112 = vpack.c.bf16 %v76, %v75
    %v113 = vpack.c.bf16 %v78, %v77
    %v114 = vpack.c.bf16 %v80, %v79
    %v115 = vpack.c.bf16 %v82, %v81
    %v116 = vpack.c.bf16 %v84, %v83
    %v117 = vld [vmem:[%s1] sm:$0xff]
    %v118 = vld [vmem:[%s1 + $0x8] sm:$0xff]
    %v119 = vld [vmem:[%s1 + $0x10] sm:$0xff]
    %v120 = vld [vmem:[%s1 + $0x18] sm:$0xff]
    %v121 = vpack.c.bf16 %v118, %v117
    %v122 = vpack.c.bf16 %v120, %v119
    %vm123 = vcmask 261120
    %v125 = vsel %vm123, %v85, 0
    %v128 = vsel %vm123, %v86, 0
    %v131 = vsel %vm123, %v87, 0
    %v134 = vsel %vm123, %v88, 0
    %v137 = vsel %vm123, %v89, 0
    %v140 = vsel %vm123, %v90, 0
    %v143 = vsel %vm123, %v91, 0
    %v146 = vsel %vm123, %v92, 0
    %v149 = vsel %vm123, %v93, 0
    %v152 = vsel %vm123, %v94, 0
    %v155 = vsel %vm123, %v95, 0
    %v158 = vsel %vm123, %v96, 0
    %v161 = vsel %vm123, %v97, 0
    %v164 = vsel %vm123, %v98, 0
    %v167 = vsel %vm123, %v99, 0
    %v170 = vsel %vm123, %v100, 0
    %v173 = vsel %vm123, %v101, 0
    %v176 = vsel %vm123, %v102, 0
    %v179 = vsel %vm123, %v103, 0
    %v182 = vsel %vm123, %v104, 0
    %v185 = vsel %vm123, %v105, 0
    %v188 = vsel %vm123, %v106, 0
    %v191 = vsel %vm123, %v107, 0
    %v194 = vsel %vm123, %v108, 0
    %v197 = vsel %vm123, %v109, 0
    %v200 = vsel %vm123, %v110, 0
    %v203 = vsel %vm123, %v111, 0
    %v206 = vsel %vm123, %v112, 0
    %v209 = vsel %vm123, %v113, 0
    %v212 = vsel %vm123, %v114, 0
    %v215 = vsel %vm123, %v115, 0
    %v218 = vsel %vm123, %v116, 0
    %220 = vmatprep.subr.bf16.mxu0 0
    %221 = vmatpush1.bf16.msra.mxu0 %v121
    %222 = vmatprep.subr.bf16.mxu0 0
    %223 = vmatpush1.bf16.msra.mxu0 %v122
    %224 = vmatprep.subr.bf16.mxu0 0
    %225 = vmatpush1.bf16.msra.mxu0 0
    %226 = vmatprep.subr.bf16.mxu0 0
    %227 = vmatpush1.bf16.msra.mxu0 0
    %228 = vmatprep.subr.bf16.mxu0 0
    %229 = vmatpush1.bf16.msra.mxu0 0
    %230 = vmatprep.subr.bf16.mxu0 0
    %231 = vmatpush1.bf16.msra.mxu0 0
    %232 = vmatprep.subr.bf16.mxu0 0
    %233 = vmatpush1.bf16.msra.mxu0 0
    %234 = vmatprep.subr.bf16.mxu0 0
    %235 = vmatpush1.bf16.msra.mxu0 0
    %236 = vmatprep.subr.bf16.mxu0 0
    %237 = vmatpush1.bf16.msra.mxu0 0
    %238 = vmatprep.subr.bf16.mxu0 0
    %239 = vmatpush1.bf16.msra.mxu0 0
    %240 = vmatprep.subr.bf16.mxu0 0
    %241 = vmatpush1.bf16.msra.mxu0 0
    %242 = vmatprep.subr.bf16.mxu0 0
    %243 = vmatpush1.bf16.msra.mxu0 0
    %244 = vmatprep.subr.bf16.mxu0 0
    %245 = vmatpush1.bf16.msra.mxu0 0
    %246 = vmatprep.subr.bf16.mxu0 0
    %247 = vmatpush1.bf16.msra.mxu0 0
    %248 = vmatprep.subr.bf16.mxu0 0
    %249 = vmatpush1.bf16.msra.mxu0 0
    %250 = vmatprep.subr.bf16.mxu0 0
    %251 = vmatpush1.bf16.msra.mxu0 0
    %252 = vmatprep.mubr.bf16.mxu0 0
    %253 = vmatmul.mubr.bf16.gmra.mrb[0].mxu0 %v125
    %v254 = vpop.f32.mrb[0].mxu0
    %v255 = vadd.f32 0.0, %v254
    %v256 = vpop.f32.mrb[0].mxu0
    %v257 = vpop.f32.mrb[0].mxu0
    %v258 = vadd.f32 0.0, %v257
    %v259 = vpop.f32.mrb[0].mxu0
    %260 = vmatprep.mubr.bf16.mxu0 0
    %261 = vmatmul.mubr.bf16.gmra.mrb[0].mxu0 %v128
    %v262 = vpop.f32.mrb[0].mxu0
    %v263 = vadd.f32 0.0, %v262
    %v264 = vpop.f32.mrb[0].mxu0
    %v265 = vpop.f32.mrb[0].mxu0
    %v266 = vadd.f32 0.0, %v265
    %v267 = vpop.f32.mrb[0].mxu0
    %268 = vmatprep.mubr.bf16.mxu0 0
    %269 = vmatmul.mubr.bf16.gmra.mrb[0].mxu0 %v131
    %v270 = vpop.f32.mrb[0].mxu0
    %v271 = vadd.f32 0.0, %v270
    %v272 = vpop.f32.mrb[0].mxu0
    %v273 = vpop.f32.mrb[0].mxu0
    %v274 = vadd.f32 0.0, %v273
    %v275 = vpop.f32.mrb[0].mxu0
    %276 = vmatprep.mubr.bf16.mxu0 0
    %277 = vmatmul.mubr.bf16.gmra.mrb[0].mxu0 %v134
    %v278 = vpop.f32.mrb[0].mxu0
    %v279 = vadd.f32 0.0, %v278
    %v280 = vpop.f32.mrb[0].mxu0
    %v281 = vpop.f32.mrb[0].mxu0
    %v282 = vadd.f32 0.0, %v281
    %v283 = vpop.f32.mrb[0].mxu0
    %284 = vmatprep.mubr.bf16.mxu0 0
    %285 = vmatmul.mubr.bf16.gmra.mrb[0].mxu0 %v137
    %v286 = vpop.f32.mrb[0].mxu0
    %v287 = vadd.f32 0.0, %v286
    %v288 = vpop.f32.mrb[0].mxu0
    %v289 = vpop.f32.mrb[0].mxu0
    %v290 = vadd.f32 0.0, %v289
    %v291 = vpop.f32.mrb[0].mxu0
    %292 = vmatprep.mubr.bf16.mxu0 0
    %293 = vmatmul.mubr.bf16.gmra.mrb[0].mxu0 %v140
    %v294 = vpop.f32.mrb[0].mxu0
    %v295 = vadd.f32 0.0, %v294
    %v296 = vpop.f32.mrb[0].mxu0
    %v297 = vpop.f32.mrb[0].mxu0
    %v298 = vadd.f32 0.0, %v297
    %v299 = vpop.f32.mrb[0].mxu0
    %300 = vmatprep.mubr.bf16.mxu0 0
    %301 = vmatmul.mubr.bf16.gmra.mrb[0].mxu0 %v143
    %v302 = vpop.f32.mrb[0].mxu0
    %v303 = vadd.f32 0.0, %v302
    %v304 = vpop.f32.mrb[0].mxu0
    %v305 = vpop.f32.mrb[0].mxu0
    %v306 = vadd.f32 0.0, %v305
    %v307 = vpop.f32.mrb[0].mxu0
    %308 = vmatprep.mubr.bf16.mxu0 0
    %309 = vmatmul.mubr.bf16.gmra.mrb[0].mxu0 %v146
    %v310 = vpop.f32.mrb[0].mxu0
    %v311 = vadd.f32 0.0, %v310
    %v312 = vpop.f32.mrb[0].mxu0
    %v313 = vpop.f32.mrb[0].mxu0
    %v314 = vadd.f32 0.0, %v313
    %v315 = vpop.f32.mrb[0].mxu0
    %316 = vmatprep.mubr.bf16.mxu0 0
    %317 = vmatmul.mubr.bf16.gmra.mrb[0].mxu0 %v149
    %v318 = vpop.f32.mrb[0].mxu0
    %v319 = vadd.f32 0.0, %v318
    %v320 = vpop.f32.mrb[0].mxu0
    %v321 = vpop.f32.mrb[0].mxu0
    %v322 = vadd.f32 0.0, %v321
    %v323 = vpop.f32.mrb[0].mxu0
    %324 = vmatprep.mubr.bf16.mxu0 0
    %325 = vmatmul.mubr.bf16.gmra.mrb[0].mxu0 %v152
    %v326 = vpop.f32.mrb[0].mxu0
    %v327 = vadd.f32 0.0, %v326
    %v328 = vpop.f32.mrb[0].mxu0
    %v329 = vpop.f32.mrb[0].mxu0
    %v330 = vadd.f32 0.0, %v329
    %v331 = vpop.f32.mrb[0].mxu0
    %332 = vmatprep.mubr.bf16.mxu0 0
    %333 = vmatmul.mubr.bf16.gmra.mrb[0].mxu0 %v155
    %v334 = vpop.f32.mrb[0].mxu0
    %v335 = vadd.f32 0.0, %v334
    %v336 = vpop.f32.mrb[0].mxu0
    %v337 = vpop.f32.mrb[0].mxu0
    %v338 = vadd.f32 0.0, %v337
    %v339 = vpop.f32.mrb[0].mxu0
    %340 = vmatprep.mubr.bf16.mxu0 0
    %341 = vmatmul.mubr.bf16.gmra.mrb[0].mxu0 %v158
    %v342 = vpop.f32.mrb[0].mxu0
    %v343 = vadd.f32 0.0, %v342
    %v344 = vpop.f32.mrb[0].mxu0
    %v345 = vpop.f32.mrb[0].mxu0
    %v346 = vadd.f32 0.0, %v345
    %v347 = vpop.f32.mrb[0].mxu0
    %348 = vmatprep.mubr.bf16.mxu0 0
    %349 = vmatmul.mubr.bf16.gmra.mrb[0].mxu0 %v161
    %v350 = vpop.f32.mrb[0].mxu0
    %v351 = vadd.f32 0.0, %v350
    %v352 = vpop.f32.mrb[0].mxu0
    %v353 = vpop.f32.mrb[0].mxu0
    %v354 = vadd.f32 0.0, %v353
    %v355 = vpop.f32.mrb[0].mxu0
    %356 = vmatprep.mubr.bf16.mxu0 0
    %357 = vmatmul.mubr.bf16.gmra.mrb[0].mxu0 %v164
    %v358 = vpop.f32.mrb[0].mxu0
    %v359 = vadd.f32 0.0, %v358
    %v360 = vpop.f32.mrb[0].mxu0
    %v361 = vpop.f32.mrb[0].mxu0
    %v362 = vadd.f32 0.0, %v361
    %v363 = vpop.f32.mrb[0].mxu0
    %364 = vmatprep.mubr.bf16.mxu0 0
    %365 = vmatmul.mubr.bf16.gmra.mrb[0].mxu0 %v167
    %v366 = vpop.f32.mrb[0].mxu0
    %v367 = vadd.f32 0.0, %v366
    %v368 = vpop.f32.mrb[0].mxu0
    %v369 = vpop.f32.mrb[0].mxu0
    %v370 = vadd.f32 0.0, %v369
    %v371 = vpop.f32.mrb[0].mxu0
    %372 = vmatprep.mubr.bf16.mxu0 0
    %373 = vmatmul.mubr.bf16.gmra.mrb[0].mxu0 %v170
    %v374 = vpop.f32.mrb[0].mxu0
    %v375 = vadd.f32 0.0, %v374
    %v376 = vpop.f32.mrb[0].mxu0
    %v377 = vpop.f32.mrb[0].mxu0
    %v378 = vadd.f32 0.0, %v377
    %v379 = vpop.f32.mrb[0].mxu0
    %380 = vmatprep.mubr.bf16.mxu0 0
    %381 = vmatmul.mubr.bf16.gmra.mrb[0].mxu0 %v173
    %v382 = vpop.f32.mrb[0].mxu0
    %v383 = vadd.f32 0.0, %v382
    %v384 = vpop.f32.mrb[0].mxu0
    %v385 = vpop.f32.mrb[0].mxu0
    %v386 = vadd.f32 0.0, %v385
    %v387 = vpop.f32.mrb[0].mxu0
    %388 = vmatprep.mubr.bf16.mxu0 0
    %389 = vmatmul.mubr.bf16.gmra.mrb[0].mxu0 %v176
    %v390 = vpop.f32.mrb[0].mxu0
    %v391 = vadd.f32 0.0, %v390
    %v392 = vpop.f32.mrb[0].mxu0
    %v393 = vpop.f32.mrb[0].mxu0
    %v394 = vadd.f32 0.0, %v393
    %v395 = vpop.f32.mrb[0].mxu0
    %396 = vmatprep.mubr.bf16.mxu0 0
    %397 = vmatmul.mubr.bf16.gmra.mrb[0].mxu0 %v179
    %v398 = vpop.f32.mrb[0].mxu0
    %v399 = vadd.f32 0.0, %v398
    %v400 = vpop.f32.mrb[0].mxu0
    %v401 = vpop.f32.mrb[0].mxu0
    %v402 = vadd.f32 0.0, %v401
    %v403 = vpop.f32.mrb[0].mxu0
    %404 = vmatprep.mubr.bf16.mxu0 0
    %405 = vmatmul.mubr.bf16.gmra.mrb[0].mxu0 %v182
    %v406 = vpop.f32.mrb[0].mxu0
    %v407 = vadd.f32 0.0, %v406
    %v408 = vpop.f32.mrb[0].mxu0
    %v409 = vpop.f32.mrb[0].mxu0
    %v410 = vadd.f32 0.0, %v409
    %v411 = vpop.f32.mrb[0].mxu0
    %412 = vmatprep.mubr.bf16.mxu0 0
    %413 = vmatmul.mubr.bf16.gmra.mrb[0].mxu0 %v185
    %v414 = vpop.f32.mrb[0].mxu0
    %v415 = vadd.f32 0.0, %v414
    %v416 = vpop.f32.mrb[0].mxu0
    %v417 = vpop.f32.mrb[0].mxu0
    %v418 = vadd.f32 0.0, %v417
    %v419 = vpop.f32.mrb[0].mxu0
    %420 = vmatprep.mubr.bf16.mxu0 0
    %421 = vmatmul.mubr.bf16.gmra.mrb[0].mxu0 %v188
    %v422 = vpop.f32.mrb[0].mxu0
    %v423 = vadd.f32 0.0, %v422
    %v424 = vpop.f32.mrb[0].mxu0
    %v425 = vpop.f32.mrb[0].mxu0
    %v426 = vadd.f32 0.0, %v425
    %v427 = vpop.f32.mrb[0].mxu0
    %428 = vmatprep.mubr.bf16.mxu0 0
    %429 = vmatmul.mubr.bf16.gmra.mrb[0].mxu0 %v191
    %v430 = vpop.f32.mrb[0].mxu0
    %v431 = vadd.f32 0.0, %v430
    %v432 = vpop.f32.mrb[0].mxu0
    %v433 = vpop.f32.mrb[0].mxu0
    %v434 = vadd.f32 0.0, %v433
    %v435 = vpop.f32.mrb[0].mxu0
    %436 = vmatprep.mubr.bf16.mxu0 0
    %437 = vmatmul.mubr.bf16.gmra.mrb[0].mxu0 %v194
    %v438 = vpop.f32.mrb[0].mxu0
    %v439 = vadd.f32 0.0, %v438
    %v440 = vpop.f32.mrb[0].mxu0
    %v441 = vpop.f32.mrb[0].mxu0
    %v442 = vadd.f32 0.0, %v441
    %v443 = vpop.f32.mrb[0].mxu0
    %444 = vmatprep.mubr.bf16.mxu0 0
    %445 = vmatmul.mubr.bf16.gmra.mrb[0].mxu0 %v197
    %v446 = vpop.f32.mrb[0].mxu0
    %v447 = vadd.f32 0.0, %v446
    %v448 = vpop.f32.mrb[0].mxu0
    %v449 = vpop.f32.mrb[0].mxu0
    %v450 = vadd.f32 0.0, %v449
    %v451 = vpop.f32.mrb[0].mxu0
    %452 = vmatprep.mubr.bf16.mxu0 0
    %453 = vmatmul.mubr.bf16.gmra.mrb[0].mxu0 %v200
    %v454 = vpop.f32.mrb[0].mxu0
    %v455 = vadd.f32 0.0, %v454
    %v456 = vpop.f32.mrb[0].mxu0
    %v457 = vpop.f32.mrb[0].mxu0
    %v458 = vadd.f32 0.0, %v457
    %v459 = vpop.f32.mrb[0].mxu0
    %460 = vmatprep.mubr.bf16.mxu0 0
    %461 = vmatmul.mubr.bf16.gmra.mrb[0].mxu0 %v203
    %v462 = vpop.f32.mrb[0].mxu0
    %v463 = vadd.f32 0.0, %v462
    %v464 = vpop.f32.mrb[0].mxu0
    %v465 = vpop.f32.mrb[0].mxu0
    %v466 = vadd.f32 0.0, %v465
    %v467 = vpop.f32.mrb[0].mxu0
    %468 = vmatprep.mubr.bf16.mxu0 0
    %469 = vmatmul.mubr.bf16.gmra.mrb[0].mxu0 %v206
    %v470 = vpop.f32.mrb[0].mxu0
    %v471 = vadd.f32 0.0, %v470
    %v472 = vpop.f32.mrb[0].mxu0
    %v473 = vpop.f32.mrb[0].mxu0
    %v474 = vadd.f32 0.0, %v473
    %v475 = vpop.f32.mrb[0].mxu0
    %476 = vmatprep.mubr.bf16.mxu0 0
    %477 = vmatmul.mubr.bf16.gmra.mrb[0].mxu0 %v209
    %v478 = vpop.f32.mrb[0].mxu0
    %v479 = vadd.f32 0.0, %v478
    %v480 = vpop.f32.mrb[0].mxu0
    %v481 = vpop.f32.mrb[0].mxu0
    %v482 = vadd.f32 0.0, %v481
    %v483 = vpop.f32.mrb[0].mxu0
    %484 = vmatprep.mubr.bf16.mxu0 0
    %485 = vmatmul.mubr.bf16.gmra.mrb[0].mxu0 %v212
    %v486 = vpop.f32.mrb[0].mxu0
    %v487 = vadd.f32 0.0, %v486
    %v488 = vpop.f32.mrb[0].mxu0
    %v489 = vpop.f32.mrb[0].mxu0
    %v490 = vadd.f32 0.0, %v489
    %v491 = vpop.f32.mrb[0].mxu0
    %492 = vmatprep.mubr.bf16.mxu0 0
    %493 = vmatmul.mubr.bf16.gmra.mrb[0].mxu0 %v215
    %v494 = vpop.f32.mrb[0].mxu0
    %v495 = vadd.f32 0.0, %v494
    %v496 = vpop.f32.mrb[0].mxu0
    %v497 = vpop.f32.mrb[0].mxu0
    %v498 = vadd.f32 0.0, %v497
    %v499 = vpop.f32.mrb[0].mxu0
    %500 = vmatprep.mubr.bf16.mxu0 0
    %501 = vmatmul.mubr.bf16.gmra.mrb[0].mxu0 %v218
    %v502 = vpop.f32.mrb[0].mxu0
    %v503 = vadd.f32 0.0, %v502
    %v504 = vpop.f32.mrb[0].mxu0
    %v505 = vpop.f32.mrb[0].mxu0
    %v506 = vadd.f32 0.0, %v505
    %v507 = vpop.f32.mrb[0].mxu0
    %508 = vdwg.mxu0
    %v509 = vld [vmem:[%s2] sm:$0x1]
    %v511 = vlaneseq
    %v512 = vshrl.u32 %v511, 7
    %v513 = vsub.s32 0, %v512
    %v514 = vrot.slane %v509, %v513
    %v516 = vsub.f32 %v255, %v514
    %v517 = vsub.f32 %v258, %v514
    %v518 = vsub.f32 %v263, %v514
    %v519 = vsub.f32 %v266, %v514
    %v520 = vsub.f32 %v271, %v514
    %v521 = vsub.f32 %v274, %v514
    %v522 = vsub.f32 %v279, %v514
    %v523 = vsub.f32 %v282, %v514
    %v524 = vsub.f32 %v287, %v514
    %v525 = vsub.f32 %v290, %v514
    %v526 = vsub.f32 %v295, %v514
    %v527 = vsub.f32 %v298, %v514
    %v528 = vsub.f32 %v303, %v514
    %v529 = vsub.f32 %v306, %v514
    %v530 = vsub.f32 %v311, %v514
    %v531 = vsub.f32 %v314, %v514
    %v532 = vsub.f32 %v319, %v514
    %v533 = vsub.f32 %v322, %v514
    %v534 = vsub.f32 %v327, %v514
    %v535 = vsub.f32 %v330, %v514
    %v536 = vsub.f32 %v335, %v514
    %v537 = vsub.f32 %v338, %v514
    %v538 = vsub.f32 %v343, %v514
    %v539 = vsub.f32 %v346, %v514
    %v540 = vsub.f32 %v351, %v514
    %v541 = vsub.f32 %v354, %v514
    %v542 = vsub.f32 %v359, %v514
    %v543 = vsub.f32 %v362, %v514
    %v544 = vsub.f32 %v367, %v514
    %v545 = vsub.f32 %v370, %v514
    %v546 = vsub.f32 %v375, %v514
    %v547 = vsub.f32 %v378, %v514
    %v548 = vsub.f32 %v383, %v514
    %v549 = vsub.f32 %v386, %v514
    %v550 = vsub.f32 %v391, %v514
    %v551 = vsub.f32 %v394, %v514
    %v552 = vsub.f32 %v399, %v514
    %v553 = vsub.f32 %v402, %v514
    %v554 = vsub.f32 %v407, %v514
    %v555 = vsub.f32 %v410, %v514
    %v556 = vsub.f32 %v415, %v514
    %v557 = vsub.f32 %v418, %v514
    %v558 = vsub.f32 %v423, %v514
    %v559 = vsub.f32 %v426, %v514
    %v560 = vsub.f32 %v431, %v514
    %v561 = vsub.f32 %v434, %v514
    %v562 = vsub.f32 %v439, %v514
    %v563 = vsub.f32 %v442, %v514
    %v564 = vsub.f32 %v447, %v514
    %v565 = vsub.f32 %v450, %v514
    %v566 = vsub.f32 %v455, %v514
    %v567 = vsub.f32 %v458, %v514
    %v568 = vsub.f32 %v463, %v514
    %v569 = vsub.f32 %v466, %v514
    %v570 = vsub.f32 %v471, %v514
    %v571 = vsub.f32 %v474, %v514
    %v572 = vsub.f32 %v479, %v514
    %v573 = vsub.f32 %v482, %v514
    %v574 = vsub.f32 %v487, %v514
    %v575 = vsub.f32 %v490, %v514
    %v576 = vsub.f32 %v495, %v514
    %v577 = vsub.f32 %v498, %v514
    %v578 = vsub.f32 %v503, %v514
    %v579 = vsub.f32 %v506, %v514
    %v580 = vld [vmem:[#allocation2] sm:$0x1]
    %v581 = vmul.f32 %v516, %v516
    %v582 = vmul.f32 %v517, %v517
    %v583 = vmul.f32 %v518, %v518
    %v584 = vmul.f32 %v519, %v519
    %v585 = vmul.f32 %v520, %v520
    %v586 = vmul.f32 %v521, %v521
    %v587 = vmul.f32 %v522, %v522
    %v588 = vmul.f32 %v523, %v523
    %v589 = vmul.f32 %v524, %v524
    %v590 = vmul.f32 %v525, %v525
    %v591 = vmul.f32 %v526, %v526
    %v592 = vmul.f32 %v527, %v527
    %v593 = vmul.f32 %v528, %v528
    %v594 = vmul.f32 %v529, %v529
    %v595 = vmul.f32 %v530, %v530
    %v596 = vmul.f32 %v531, %v531
    %v597 = vmul.f32 %v532, %v532
    %v598 = vmul.f32 %v533, %v533
    %v599 = vmul.f32 %v534, %v534
    %v600 = vmul.f32 %v535, %v535
    %v601 = vmul.f32 %v536, %v536
    %v602 = vmul.f32 %v537, %v537
    %v603 = vmul.f32 %v538, %v538
    %v604 = vmul.f32 %v539, %v539
    %v605 = vmul.f32 %v540, %v540
    %v606 = vmul.f32 %v541, %v541
    %v607 = vmul.f32 %v542, %v542
    %v608 = vmul.f32 %v543, %v543
    %v609 = vmul.f32 %v544, %v544
    %v610 = vmul.f32 %v545, %v545
    %v611 = vmul.f32 %v546, %v546
    %v612 = vmul.f32 %v547, %v547
    %v613 = vmul.f32 %v548, %v548
    %v614 = vmul.f32 %v549, %v549
    %v615 = vmul.f32 %v550, %v550
    %v616 = vmul.f32 %v551, %v551
    %v617 = vmul.f32 %v552, %v552
    %v618 = vmul.f32 %v553, %v553
    %v619 = vmul.f32 %v554, %v554
    %v620 = vmul.f32 %v555, %v555
    %v621 = vmul.f32 %v556, %v556
    %v622 = vmul.f32 %v557, %v557
    %v623 = vmul.f32 %v558, %v558
    %v624 = vmul.f32 %v559, %v559
    %v625 = vmul.f32 %v560, %v560
    %v626 = vmul.f32 %v561, %v561
    %v627 = vmul.f32 %v562, %v562
    %v628 = vmul.f32 %v563, %v563
    %v629 = vmul.f32 %v564, %v564
    %v630 = vmul.f32 %v565, %v565
    %v631 = vmul.f32 %v566, %v566
    %v632 = vmul.f32 %v567, %v567
    %v633 = vmul.f32 %v568, %v568
    %v634 = vmul.f32 %v569, %v569
    %v635 = vmul.f32 %v570, %v570
    %v636 = vmul.f32 %v571, %v571
    %v637 = vmul.f32 %v572, %v572
    %v638 = vmul.f32 %v573, %v573
    %v639 = vmul.f32 %v574, %v574
    %v640 = vmul.f32 %v575, %v575
    %v641 = vmul.f32 %v576, %v576
    %v642 = vmul.f32 %v577, %v577
    %v643 = vmul.f32 %v578, %v578
    %v644 = vmul.f32 %v579, %v579
    %v645 = vadd.f32 %v581, %v582
    %v646 = vadd.f32 %v645, %v583
    %v647 = vadd.f32 %v646, %v584
    %v648 = vadd.f32 %v647, %v585
    %v649 = vadd.f32 %v648, %v586
    %v650 = vadd.f32 %v649, %v587
    %v651 = vadd.f32 %v650, %v588
    %v652 = vadd.f32 %v651, %v589
    %v653 = vadd.f32 %v652, %v590
    %v654 = vadd.f32 %v653, %v591
    %v655 = vadd.f32 %v654, %v592
    %v656 = vadd.f32 %v655, %v593
    %v657 = vadd.f32 %v656, %v594
    %v658 = vadd.f32 %v657, %v595
    %v659 = vadd.f32 %v658, %v596
    %v660 = vadd.f32 %v659, %v597
    %v661 = vadd.f32 %v660, %v598
    %v662 = vadd.f32 %v661, %v599
    %v663 = vadd.f32 %v662, %v600
    %v664 = vadd.f32 %v663, %v601
    %v665 = vadd.f32 %v664, %v602
    %v666 = vadd.f32 %v665, %v603
    %v667 = vadd.f32 %v666, %v604
    %v668 = vadd.f32 %v667, %v605
    %v669 = vadd.f32 %v668, %v606
    %v670 = vadd.f32 %v669, %v607
    %v671 = vadd.f32 %v670, %v608
    %v672 = vadd.f32 %v671, %v609
    %v673 = vadd.f32 %v672, %v610
    %v674 = vadd.f32 %v673, %v611
    %v675 = vadd.f32 %v674, %v612
    %v676 = vadd.f32 %v675, %v613
    %v677 = vadd.f32 %v676, %v614
    %v678 = vadd.f32 %v677, %v615
    %v679 = vadd.f32 %v678, %v616
    %v680 = vadd.f32 %v679, %v617
    %v681 = vadd.f32 %v680, %v618
    %v682 = vadd.f32 %v681, %v619
    %v683 = vadd.f32 %v682, %v620
    %v684 = vadd.f32 %v683, %v621
    %v685 = vadd.f32 %v684, %v622
    %v686 = vadd.f32 %v685, %v623
    %v687 = vadd.f32 %v686, %v624
    %v688 = vadd.f32 %v687, %v625
    %v689 = vadd.f32 %v688, %v626
    %v690 = vadd.f32 %v689, %v627
    %v691 = vadd.f32 %v690, %v628
    %v692 = vadd.f32 %v691, %v629
    %v693 = vadd.f32 %v692, %v630
    %v694 = vadd.f32 %v693, %v631
    %v695 = vadd.f32 %v694, %v632
    %v696 = vadd.f32 %v695, %v633
    %v697 = vadd.f32 %v696, %v634
    %v698 = vadd.f32 %v697, %v635
    %v699 = vadd.f32 %v698, %v636
    %v700 = vadd.f32 %v699, %v637
    %v701 = vadd.f32 %v700, %v638
    %v702 = vadd.f32 %v701, %v639
    %v703 = vadd.f32 %v702, %v640
    %v704 = vadd.f32 %v703, %v641
    %v705 = vadd.f32 %v704, %v642
    %v706 = vadd.f32 %v705, %v643
    %v707 = vadd.f32 %v706, %v644
    %v708 = vrot.slane %v707, 4
    %v709 = vadd.f32 %v707, %v708
    %v710 = vrot.slane %v709, 2
    %v711 = vadd.f32 %v709, %v710
    %v712 = vrot.slane %v711, 1
    %v713 = vadd.f32 %v711, %v712
    %v714 = vadd.f32 %v580, %v713
    %715 = vst [vmem:[#allocation2] sm:$0x1] %v714
    // Predicated region
    $region18: #{tpu_custom_call.1} parent=1 // pred_check
      _
    $region19: #{tpu_custom_call.1} parent=1 // pred_check_branch
      %717 = sbr.rel (0) target = $region21
    $region20: #{tpu_custom_call.1} parent=1 // pred_region
      %s719 = ssub.s32 16, 16
      %720 = vsyncadd [#allocation3], %s719
      %s722 = sshll.u32 [#allocation2], 4
      %s723 = int_to_ptr.vmem [resolvable:$true] %s722
      %725 = dma.vmem_to_hbm [thread:$0]  %s723, 16, %s3, [#allocation3]
    $region21: #{tpu_custom_call.1} parent=1 // pred_fallthru
      _
    // Predicated region
    $region22: #{tpu_custom_call.1} parent=1 // pred_check
      _
    $region23: #{tpu_custom_call.1} parent=1 // pred_check_branch
      %727 = sbr.rel (0) target = $region25
    $region24: #{tpu_custom_call.1} parent=1 // pred_region
      %728 = dma.done [#allocation3], 16
    $region25: #{tpu_custom_call.1} parent=1 // pred_fallthru
      _
    %729 = vsyncpa [#allocation3], 1

</llo_original>
